<compile_context>
chip_gen: v5e
topology: v5e:2x2
jax: 0.10.0
libtpu: 0.0.40
codegen_flags: <defaults>
</compile_context>

<pallas_src>
import jax
import jax.numpy as jnp
from jax.experimental import pallas as pl
from jax.experimental.pallas import tpu as pltpu


# ----------------------------------------------------------------------------
# Glue: bilinear grid_sample (align_corners=True), as used by _query_feature
# ----------------------------------------------------------------------------
def grid_sample_bilinear(feat, grid_xy):
    """feat: [B, C, H, W], grid_xy: [B, N, 2] in [-1, 1] (x=width, y=height).
    Equivalent to torch.grid_sample(feat, grid[:, :, None, :],
    mode='bilinear', align_corners=True).squeeze(-1) -> [B, C, N]."""
    _, _, Hh, Ww = feat.shape
    x = (grid_xy[..., 0] + 1.0) * 0.5 * (Ww - 1)
    y = (grid_xy[..., 1] + 1.0) * 0.5 * (Hh - 1)
    x0 = jnp.floor(x)
    y0 = jnp.floor(y)
    wx1 = x - x0
    wy1 = y - y0
    wx0 = 1.0 - wx1
    wy0 = 1.0 - wy1
    x0i = jnp.clip(x0, 0, Ww - 1).astype(jnp.int32)
    x1i = jnp.clip(x0 + 1, 0, Ww - 1).astype(jnp.int32)
    y0i = jnp.clip(y0, 0, Hh - 1).astype(jnp.int32)
    y1i = jnp.clip(y0 + 1, 0, Hh - 1).astype(jnp.int32)

    def gather_one(fm, yi, xi):  # fm [C,H,W], yi/xi [N] -> [C, N]
        return fm[:, yi, xi]

    g = jax.vmap(gather_one)
    v00 = g(feat, y0i, x0i)
    v01 = g(feat, y0i, x1i)
    v10 = g(feat, y1i, x0i)
    v11 = g(feat, y1i, x1i)
    w00 = (wy0 * wx0)[:, None, :]
    w01 = (wy0 * wx1)[:, None, :]
    w10 = (wy1 * wx0)[:, None, :]
    w11 = (wy1 * wx1)[:, None, :]
    return v00 * w00 + v01 * w01 + v10 * w10 + v11 * w11


def query_image_feature(feat, uv):
    """Mirrors TexModel._query_feature: clip to [-1,1], flip y, sample."""
    xy = jnp.clip(uv, -1.0, 1.0)
    xy = xy.at[..., 1].set(-xy[..., 1])
    return grid_sample_bilinear(feat, xy)  # [B, C, N]


# ----------------------------------------------------------------------------
# Glue: PointFeat.query_barycentirc_feats (barycentric interpolation on mesh)
# ----------------------------------------------------------------------------
def _barycentric_weights_of_projection(p, v0, v1, v2):
    """Barycentric coords of projection of p onto the triangle plane."""
    u = v1 - v0
    v = v2 - v0
    w = p - v0
    n = jnp.cross(u, v)
    inv = 1.0 / (jnp.sum(n * n, axis=-1, keepdims=True) + 1e-9)
    b2 = jnp.sum(jnp.cross(u, w) * n, axis=-1, keepdims=True) * inv
    b1 = jnp.sum(jnp.cross(w, v) * n, axis=-1, keepdims=True) * inv
    b0 = 1.0 - b1 - b2
    return jnp.concatenate([b0, b1, b2], axis=-1)  # [..., 3]


def query_barycentric_feats(pts, verts, faces, vert_feats):
    """pts [B,N,3], verts [B,V,3], faces [F,3] int32, vert_feats [B,V,C] -> [B,N,C]."""
    # TODO(synk): exact PointFeat uses point-to-triangle distance for the closest
    # face search; nearest face *centroid* is used here as the synthetic stand-in.
    def per_batch(p, v, vf):
        tri = v[faces]                                   # [F, 3, 3]
        cen = tri.mean(axis=1)                           # [F, 3]
        d2 = jnp.sum((p[:, None, :] - cen[None]) ** 2, axis=-1)  # [N, F]
        fid = jnp.argmin(d2, axis=-1)                    # [N]
        fv = faces[fid]                                  # [N, 3]
        v0, v1, v2 = v[fv[:, 0]], v[fv[:, 1]], v[fv[:, 2]]
        w = _barycentric_weights_of_projection(p, v0, v1, v2)    # [N, 3]
        f0, f1, f2 = vf[fv[:, 0]], vf[fv[:, 1]], vf[fv[:, 2]]
        return w[:, 0:1] * f0 + w[:, 1:2] * f1 + w[:, 2:3] * f2

    return jax.vmap(per_batch)(pts, verts, vert_feats)


# ----------------------------------------------------------------------------
# Glue: TexModel.query_feature / extract_features (kept channel-first)
# ----------------------------------------------------------------------------
def query_feature(planes, pts, smplx_pts, faces):
    F_p, L_p, B_p, R_p = planes
    C = F_p.shape[1]
    C2 = C // 2
    F1, F2 = F_p[:, :C2], F_p[:, C2:]
    L1, L2 = L_p[:, :C2], L_p[:, C2:]
    B1, B2 = B_p[:, :C2], B_p[:, C2:]
    R1, R2 = R_p[:, :C2], R_p[:, C2:]

    xy = pts[:, :, :2]
    zy = jnp.stack([-pts[:, :, 2], pts[:, :, 1]], axis=-1)
    sxy = smplx_pts[:, :, :2]
    szy = jnp.stack([-smplx_pts[:, :, 2], smplx_pts[:, :, 1]], axis=-1)

    F_feat = query_image_feature(F1, xy)
    B_feat = query_image_feature(B1, xy)
    R_feat = query_image_feature(R1, zy)
    L_feat = query_image_feature(L1, zy)
    three_plane = (B_feat + R_feat + L_feat) / 3.0
    triplane = jnp.concatenate([F_feat, three_plane], axis=1)         # [B, C, N]

    sF = query_image_feature(F2, sxy)
    sB = query_image_feature(B2, sxy)
    sR = query_image_feature(R2, szy)
    sL = query_image_feature(L2, szy)
    s_three = (sB + sR + sL) / 3.0
    s_triplane = jnp.concatenate([sF, s_three], axis=1)               # [B, C, V]

    bary = query_barycentric_feats(
        pts, smplx_pts, faces, jnp.transpose(s_triplane, (0, 2, 1)))  # [B, N, C]
    return jnp.concatenate(
        [triplane, jnp.transpose(bary, (0, 2, 1))], axis=1)           # [B, 2C, N]


def extract_features_cf(color_planes, nrm_planes, pts, smpl_pts, faces):
    color_feat = query_feature(color_planes, pts, smpl_pts, faces)    # [B, 2C, N]
    nrm_feat = query_feature(nrm_planes, pts, smpl_pts, faces)        # [B, 2C, N]
    return jnp.concatenate([color_feat, nrm_feat], axis=1)            # [B, 4C, N]


def assemble_decoder_input(color_planes, nrm_planes, pts, smpl_v, vis_class, faces):
    """Returns (x_feat bf16 [B, D_feat, N], z f32 [B, 1, N]).

    pos_dim == 1, color_freq == 0 -> coord feature is z only, no embedder;
    vis_class is unused in this configuration. The z row is kept as a tiny
    f32 side stream so the streamed bf16 feature matrix stays exactly
    D_feat = 4C rows (a multiple of 16 -> no bf16 sublane padding).
    The bf16 cast happens here (inside the jitted forward) so it fuses with
    the feature-assembly producer instead of a standalone HBM pass.
    """
    del vis_class
    rgb_feats = extract_features_cf(color_planes, nrm_planes, pts, smpl_v, faces)
    x_feat = rgb_feats.astype(jnp.bfloat16)                            # [B, 4C, N]
    z = pts[:, :, 2][:, None, :].astype(jnp.float32)                   # [B, 1, N]
    return x_feat, z


# ----------------------------------------------------------------------------
# Pallas kernel: rgb_decoder MLP (Linear+ReLU, Linear+ReLU, Linear, sigmoid)
# Channel-first, points-on-lanes layout: x [D_feat, tm] (+ z [1, tm]) -> [3, tm].
# First matmul bf16 x bf16; z applied as rank-1 f32 VPU correction; everything
# downstream stays f32 (resident f32 weights, default MXU precision).
# ----------------------------------------------------------------------------
def mlp_kernel(x_ref, z_ref, w0_ref, w0z_ref, b0_ref,
               w1_ref, b1_ref, w2_ref, b2_ref, o_ref):
    x = x_ref[...]                                                     # [Df, tm] bf16
    h = jnp.dot(w0_ref[...], x, preferred_element_type=jnp.float32)    # [H, tm] f32
    h = h + w0z_ref[...] * z_ref[...]            # rank-1 z-coordinate correction
    h = jnp.maximum(h + b0_ref[...], 0.0)
    h = jnp.dot(w1_ref[...], h, preferred_element_type=jnp.float32)
    h = jnp.maximum(h + b1_ref[...], 0.0)
    y = jnp.dot(w2_ref[...], h, preferred_element_type=jnp.float32)
    y = y + b2_ref[...]
    # sigmoid = 1 / (1 + exp(-y)): exp on EUP + approximate reciprocal (EUP),
    # keeping the divide off the VALU slots.  (Accuracy trade vs torch.sigmoid.)
    o_ref[...] = pl.reciprocal(1.0 + jnp.exp(-y), approx=True)


def _choose_tile_m(N, max_tile):
    """Largest lane-aligned point tile that fits; no forced multi-step split
    (single-TC v5e/v6e gain nothing from it, v7x already has the batch axis
    and point tiles to shard across its two TensorCores)."""
    def rup(a, b):
        return -(-a // b) * b
    return max(min(int(max_tile), rup(N, 128)), 128)


def rgb_decoder_pallas(x_feat, z, params, tile_m=8192):
    """x_feat: [B, D_feat, N] bf16, z: [B, 1, N] f32 -> [B, 3, N] f32 (channel-first)."""
    w0, b0, w1, b1, w2, b2 = params
    B, Df, N = x_feat.shape
    H = w0.shape[1]
    OUT = w2.shape[1]

    # Split w0 into the bf16 feature block (streamed matmul) and the f32 z row
    # (rank-1 VPU correction). Resident w1/w2/biases stay f32 (tiny, MXU has
    # massive slack; avoids per-tile cast work on the VALU).
    w0f = w0[:Df].T.astype(jnp.bfloat16)           # [H, Df]
    w0z = w0[Df:].T.astype(jnp.float32)            # [H, 1]
    w1t = w1.T.astype(jnp.float32)                 # [H, H]
    w2t = w2.T.astype(jnp.float32)                 # [OUT, H]
    b0t = b0.reshape(H, 1).astype(jnp.float32)
    b1t = b1.reshape(H, 1).astype(jnp.float32)
    b2t = b2.reshape(OUT, 1).astype(jnp.float32)

    tm = _choose_tile_m(N, tile_m)
    grid = (B, pl.cdiv(N, tm))                     # ragged last block handled by Pallas

    out_cf = pl.pallas_call(
        mlp_kernel,
        out_shape=jax.ShapeDtypeStruct((B, OUT, N), jnp.float32),
        grid_spec=pltpu.PrefetchScalarGridSpec(
            num_scalar_prefetch=0,
            grid=grid,
            in_specs=[
                # streaming feature tile, batch dim squeezed out of the kernel
                pl.BlockSpec((None, Df, tm), lambda b, i: (b, 0, i)),
                # tiny z side stream (1 row, f32)
                pl.BlockSpec((None, 1, tm), lambda b, i: (b, 0, i)),
                # resident weights / biases
                pl.BlockSpec((H, Df), lambda b, i: (0, 0)),
                pl.BlockSpec((H, 1), lambda b, i: (0, 0)),
                pl.BlockSpec((H, 1), lambda b, i: (0, 0)),
                pl.BlockSpec((H, H), lambda b, i: (0, 0)),
                pl.BlockSpec((H, 1), lambda b, i: (0, 0)),
                pl.BlockSpec((OUT, H), lambda b, i: (0, 0)),
                pl.BlockSpec((OUT, 1), lambda b, i: (0, 0)),
            ],
            out_specs=pl.BlockSpec((None, OUT, tm), lambda b, i: (b, 0, i)),
        ),
        compiler_params=pltpu.CompilerParams(
            dimension_semantics=("parallel", "parallel")),
    )(x_feat, z, w0f, w0z, b0t, w1t, b1t, w2t, b2t)
    return out_cf                                  # [B, OUT, N] channel-first


def tex_model_forward(color_planes, nrm_planes, pts, smpl_v, vis_class, faces, params,
                      channel_first=False):
    x_feat, z = assemble_decoder_input(
        color_planes, nrm_planes, pts, smpl_v, vis_class, faces)
    rgb_cf = rgb_decoder_pallas(x_feat, z, params)                    # [B, 3, N]
    if channel_first:
        # Lane-dense channel-first output: preferred for on-TPU consumers.
        return rgb_cf
    # PyTorch-parity layout [B, N, 3] (transpose only at the export boundary).
    return jnp.transpose(rgb_cf, (0, 2, 1))


def mlp_reference(x, params):
    w0, b0, w1, b1, w2, b2 = params
    h = jnp.maximum(x @ w0 + b0, 0.0)
    h = jnp.maximum(h @ w1 + b1, 0.0)
    return jax.nn.sigmoid(h @ w2 + b2)


# ----------------------------------------------------------------------------
if __name__ == "__main__":
    key = jax.random.PRNGKey(0)
    B, N = 2, 256
    C, Himg, Wimg = 8, 16, 16          # channels per plane feature map
    n_verts, n_faces = 24, 16
    HID = 32                            # cfg.hidden_dim // 2
    D_IN = 4 * C + 1                    # feat_dim*2 + embed_dim = 32 + 1

    keys = jax.random.split(key, 16)
    color_planes = tuple(
        jax.random.normal(keys[i], (B, C, Himg, Wimg), jnp.float32) for i in range(4))
    nrm_planes = tuple(
        jax.random.normal(keys[4 + i], (B, C, Himg, Wimg), jnp.float32) for i in range(4))
    pts = jax.random.uniform(keys[8], (B, N, 3), jnp.float32, -1.0, 1.0)
    smpl_v = jax.random.uniform(keys[9], (B, n_verts, 3), jnp.float32, -0.8, 0.8)
    vis_class = jnp.zeros((B, n_verts, 1), jnp.float32)  # unused when pos_dim == 1
    smpl_F = jax.random.randint(keys[10], (n_faces, 3), 0, n_verts, jnp.int32)

    # Deterministic synthetic rgb_decoder weights ([in, out] layout).
    w0 = 0.2 * jax.random.normal(keys[11], (D_IN, HID), jnp.float32)
    b0 = 0.05 * jax.random.normal(keys[12], (1, HID), jnp.float32)
    w1 = 0.2 * jax.random.normal(keys[13], (HID, HID), jnp.float32)
    b1 = 0.05 * jax.random.normal(keys[14], (1, HID), jnp.float32)
    w2 = 0.2 * jax.random.normal(keys[15], (HID, 3), jnp.float32)
    b2 = jnp.zeros((1, 3), jnp.float32)
    params = (w0, b0, w1, b1, w2, b2)

    fwd = jax.jit(tex_model_forward)   # jit so the bf16 cast fuses with its producer
    pred_rgb = fwd(color_planes, nrm_planes, pts, smpl_v, vis_class, smpl_F, params)
    pred_rgb = jax.block_until_ready(pred_rgb)
    assert pred_rgb.shape == (B, N, 3) and pred_rgb.dtype == jnp.float32

    # Correctness check of the Pallas decoder against a pure-JAX reference
    # (tolerance covers bf16 matmul inputs, default MXU precision on the f32
    # dots, and the approximate reciprocal in the kernel's sigmoid).
    x_feat, z = assemble_decoder_input(
        color_planes, nrm_planes, pts, smpl_v, vis_class, smpl_F)
    x_full = jnp.concatenate([x_feat.astype(jnp.float32), z], axis=1)  # [B, D_IN, N]
    ref = mlp_reference(
        jnp.transpose(x_full, (0, 2, 1)).reshape(-1, D_IN), params).reshape(B, N, 3)
    max_err = float(jnp.max(jnp.abs(pred_rgb - ref)))
    assert max_err < 3e-2, f"mismatch vs reference: {max_err}"

    print("KERNEL_OK")
</pallas_src>

<mosaic_0001>
module attributes {stable_mosaic.version = 11 : i64} {
  func.func @mlp_kernel(%arg0: i32, %arg1: i32, %arg2: memref<1x32x256xbf16, #tpu.memory_space<vmem>>, %arg3: memref<1x1x256xf32, #tpu.memory_space<vmem>>, %arg4: memref<32x32xbf16, #tpu.memory_space<vmem>>, %arg5: memref<32x1xf32, #tpu.memory_space<vmem>>, %arg6: memref<32x1xf32, #tpu.memory_space<vmem>>, %arg7: memref<32x32xf32, #tpu.memory_space<vmem>>, %arg8: memref<32x1xf32, #tpu.memory_space<vmem>>, %arg9: memref<3x32xf32, #tpu.memory_space<vmem>>, %arg10: memref<3x1xf32, #tpu.memory_space<vmem>>, %arg11: memref<1x3x256xf32, #tpu.memory_space<vmem>>) attributes {dimension_semantics = [#tpu.dimension_semantics<parallel>, #tpu.dimension_semantics<parallel>], iteration_bounds = array<i64: 2, 1>, scalar_prefetch = 0 : i64, scratch_operands = 0 : i64, tpu.core_type = #tpu.core_type<tc>, window_params = [{transform_indices = @transform_0, window_bounds = array<i64: 1, 32, 256>}, {transform_indices = @transform_1, window_bounds = array<i64: 1, 1, 256>}, {pipeline_mode = #tpu.pipeline_mode<synchronous>, transform_indices = @transform_2, window_bounds = array<i64: 32, 32>}, {pipeline_mode = #tpu.pipeline_mode<synchronous>, transform_indices = @transform_3, window_bounds = array<i64: 32, 1>}, {pipeline_mode = #tpu.pipeline_mode<synchronous>, transform_indices = @transform_4, window_bounds = array<i64: 32, 1>}, {pipeline_mode = #tpu.pipeline_mode<synchronous>, transform_indices = @transform_5, window_bounds = array<i64: 32, 32>}, {pipeline_mode = #tpu.pipeline_mode<synchronous>, transform_indices = @transform_6, window_bounds = array<i64: 32, 1>}, {pipeline_mode = #tpu.pipeline_mode<synchronous>, transform_indices = @transform_7, window_bounds = array<i64: 3, 32>}, {pipeline_mode = #tpu.pipeline_mode<synchronous>, transform_indices = @transform_8, window_bounds = array<i64: 3, 1>}, {transform_indices = @transform_9, window_bounds = array<i64: 1, 3, 256>}]} {
    %c0 = arith.constant 0 : index
    %c0_0 = arith.constant 0 : index
    %c0_1 = arith.constant 0 : index
    %0 = vector.load %arg2[%c0, %c0_0, %c0_1] : memref<1x32x256xbf16, #tpu.memory_space<vmem>>, vector<1x32x256xbf16>
    %1 = vector.shape_cast %0 : vector<1x32x256xbf16> to vector<32x256xbf16>
    %c0_2 = arith.constant 0 : index
    %c0_3 = arith.constant 0 : index
    %2 = vector.load %arg4[%c0_2, %c0_3] : memref<32x32xbf16, #tpu.memory_space<vmem>>, vector<32x32xbf16>
    %cst = arith.constant dense<0.000000e+00> : vector<32x256xf32>
    %3 = tpu.matmul %2, %1, %cst {dimension_numbers = #tpu.dot_dimension_numbers<[1], [0], [0], [1], [0, 0, 1, 1], [], []>} : vector<32x32xbf16>, vector<32x256xbf16>, vector<32x256xf32> -> vector<32x256xf32>
    %c0_4 = arith.constant 0 : index
    %c0_5 = arith.constant 0 : index
    %4 = vector.load %arg5[%c0_4, %c0_5] : memref<32x1xf32, #tpu.memory_space<vmem>>, vector<32x1xf32>
    %c0_6 = arith.constant 0 : index
    %c0_7 = arith.constant 0 : index
    %c0_8 = arith.constant 0 : index
    %5 = vector.load %arg3[%c0_6, %c0_7, %c0_8] : memref<1x1x256xf32, #tpu.memory_space<vmem>>, vector<1x1x256xf32>
    %6 = vector.shape_cast %5 : vector<1x1x256xf32> to vector<1x256xf32>
    %7 = vector.broadcast %4 : vector<32x1xf32> to vector<32x256xf32>
    %8 = vector.broadcast %6 : vector<1x256xf32> to vector<32x256xf32>
    %9 = arith.mulf %7, %8 : vector<32x256xf32>
    %10 = arith.addf %3, %9 : vector<32x256xf32>
    %c0_9 = arith.constant 0 : index
    %c0_10 = arith.constant 0 : index
    %11 = vector.load %arg6[%c0_9, %c0_10] : memref<32x1xf32, #tpu.memory_space<vmem>>, vector<32x1xf32>
    %12 = vector.broadcast %11 : vector<32x1xf32> to vector<32x256xf32>
    %13 = arith.addf %10, %12 : vector<32x256xf32>
    %cst_11 = arith.constant 0.000000e+00 : f32
    %14 = vector.broadcast %cst_11 : f32 to vector<32x256xf32>
    %15 = arith.maximumf %13, %14 : vector<32x256xf32>
    %c0_12 = arith.constant 0 : index
    %c0_13 = arith.constant 0 : index
    %16 = vector.load %arg7[%c0_12, %c0_13] : memref<32x32xf32, #tpu.memory_space<vmem>>, vector<32x32xf32>
    %cst_14 = arith.constant dense<0.000000e+00> : vector<32x256xf32>
    %17 = tpu.matmul %16, %15, %cst_14 {dimension_numbers = #tpu.dot_dimension_numbers<[1], [0], [0], [1], [0, 0, 1, 1], [], []>} : vector<32x32xf32>, vector<32x256xf32>, vector<32x256xf32> -> vector<32x256xf32>
    %c0_15 = arith.constant 0 : index
    %c0_16 = arith.constant 0 : index
    %18 = vector.load %arg8[%c0_15, %c0_16] : memref<32x1xf32, #tpu.memory_space<vmem>>, vector<32x1xf32>
    %19 = vector.broadcast %18 : vector<32x1xf32> to vector<32x256xf32>
    %20 = arith.addf %17, %19 : vector<32x256xf32>
    %cst_17 = arith.constant 0.000000e+00 : f32
    %21 = vector.broadcast %cst_17 : f32 to vector<32x256xf32>
    %22 = arith.maximumf %20, %21 : vector<32x256xf32>
    %c0_18 = arith.constant 0 : index
    %c0_19 = arith.constant 0 : index
    %23 = vector.load %arg9[%c0_18, %c0_19] : memref<3x32xf32, #tpu.memory_space<vmem>>, vector<3x32xf32>
    %cst_20 = arith.constant dense<0.000000e+00> : vector<3x256xf32>
    %24 = tpu.matmul %23, %22, %cst_20 {dimension_numbers = #tpu.dot_dimension_numbers<[1], [0], [0], [1], [0, 0, 1, 1], [], []>} : vector<3x32xf32>, vector<32x256xf32>, vector<3x256xf32> -> vector<3x256xf32>
    %c0_21 = arith.constant 0 : index
    %c0_22 = arith.constant 0 : index
    %25 = vector.load %arg10[%c0_21, %c0_22] : memref<3x1xf32, #tpu.memory_space<vmem>>, vector<3x1xf32>
    %26 = vector.broadcast %25 : vector<3x1xf32> to vector<3x256xf32>
    %27 = arith.addf %24, %26 : vector<3x256xf32>
    %cst_23 = arith.constant 0.000000e+00 : f32
    %28 = vector.broadcast %cst_23 : f32 to vector<3x256xf32>
    %29 = arith.subf %28, %27 : vector<3x256xf32>
    %30 = math.exp %29 : vector<3x256xf32>
    %cst_24 = arith.constant 1.000000e+00 : f32
    %31 = vector.broadcast %cst_24 : f32 to vector<3x256xf32>
    %32 = arith.addf %31, %30 : vector<3x256xf32>
    %33 = tpu.reciprocal %32 {approx = true} : vector<3x256xf32> -> vector<3x256xf32>
    %c0_25 = arith.constant 0 : index
    %c0_26 = arith.constant 0 : index
    %c0_27 = arith.constant 0 : index
    %34 = vector.load %arg11[%c0_25, %c0_26, %c0_27] : memref<1x3x256xf32, #tpu.memory_space<vmem>>, vector<1x3x256xf32>
    %35 = vector.shape_cast %34 : vector<1x3x256xf32> to vector<3x256xf32>
    %36 = vector.shape_cast %33 : vector<3x256xf32> to vector<1x3x256xf32>
    tpu.vector_store %arg11[%c0_25, %c0_26, %c0_27], %36 {strides = array<i32>} : memref<1x3x256xf32, #tpu.memory_space<vmem>>, vector<1x3x256xf32>,
    return
  }
  func.func @transform_0(%arg0: i32, %arg1: i32) -> (i32, i32, i32) {
    %c0_i32 = arith.constant 0 : i32
    %c0_i32_0 = arith.constant 0 : i32
    return %arg0, %c0_i32, %arg1 : i32, i32, i32
  }
  func.func @transform_1(%arg0: i32, %arg1: i32) -> (i32, i32, i32) {
    %c0_i32 = arith.constant 0 : i32
    %c0_i32_0 = arith.constant 0 : i32
    return %arg0, %c0_i32, %arg1 : i32, i32, i32
  }
  func.func @transform_2(%arg0: i32, %arg1: i32) -> (i32, i32) {
    %c0_i32 = arith.constant 0 : i32
    %c0_i32_0 = arith.constant 0 : i32
    %c0_i32_1 = arith.constant 0 : i32
    return %c0_i32, %c0_i32_0 : i32, i32
  }
  func.func @transform_3(%arg0: i32, %arg1: i32) -> (i32, i32) {
    %c0_i32 = arith.constant 0 : i32
    %c0_i32_0 = arith.constant 0 : i32
    %c0_i32_1 = arith.constant 0 : i32
    return %c0_i32, %c0_i32_0 : i32, i32
  }
  func.func @transform_4(%arg0: i32, %arg1: i32) -> (i32, i32) {
    %c0_i32 = arith.constant 0 : i32
    %c0_i32_0 = arith.constant 0 : i32
    %c0_i32_1 = arith.constant 0 : i32
    return %c0_i32, %c0_i32_0 : i32, i32
  }
  func.func @transform_5(%arg0: i32, %arg1: i32) -> (i32, i32) {
    %c0_i32 = arith.constant 0 : i32
    %c0_i32_0 = arith.constant 0 : i32
    %c0_i32_1 = arith.constant 0 : i32
    return %c0_i32, %c0_i32_0 : i32, i32
  }
  func.func @transform_6(%arg0: i32, %arg1: i32) -> (i32, i32) {
    %c0_i32 = arith.constant 0 : i32
    %c0_i32_0 = arith.constant 0 : i32
    %c0_i32_1 = arith.constant 0 : i32
    return %c0_i32, %c0_i32_0 : i32, i32
  }
  func.func @transform_7(%arg0: i32, %arg1: i32) -> (i32, i32) {
    %c0_i32 = arith.constant 0 : i32
    %c0_i32_0 = arith.constant 0 : i32
    %c0_i32_1 = arith.constant 0 : i32
    return %c0_i32, %c0_i32_0 : i32, i32
  }
  func.func @transform_8(%arg0: i32, %arg1: i32) -> (i32, i32) {
    %c0_i32 = arith.constant 0 : i32
    %c0_i32_0 = arith.constant 0 : i32
    %c0_i32_1 = arith.constant 0 : i32
    return %c0_i32, %c0_i32_0 : i32, i32
  }
  func.func @transform_9(%arg0: i32, %arg1: i32) -> (i32, i32, i32) {
    %c0_i32 = arith.constant 0 : i32
    %c0_i32_0 = arith.constant 0 : i32
    return %arg0, %c0_i32, %arg1 : i32, i32, i32
  }
}

</mosaic_0001>

<llo_original>
// kernel: tex_model_forward.1
$region0: #{tex_model_forward.1}
  #allocation0 [shape = 'u32[]', space=smem, size = 0x4, offset = 0x4, fixed_abs, tag = 'smem constant byte address 0x4 - core index']
  #allocation1 [shape = 'u32[72,128]{1,0:T(1,128)}', space=vmem, size = 0x9000, scoped, tag = 'internal scratch']
  %s0 = inlined_call_operand.vmem [shape: bf16[2,32,256], index: 0, kind: input, shape index: {}]
  %s1 = inlined_call_operand.vmem [shape: f32[2,1,256], index: 1, kind: input, shape index: {}]
  %s2 = inlined_call_operand.vmem [shape: bf16[32,32], index: 2, kind: input, shape index: {}]
  %s3 = inlined_call_operand.vmem [shape: f32[32,1], index: 3, kind: input, shape index: {}]
  %s4 = inlined_call_operand.vmem [shape: f32[32,1], index: 4, kind: input, shape index: {}]
  %s5 = inlined_call_operand.vmem [shape: f32[32,32], index: 5, kind: input, shape index: {}]
  %s6 = inlined_call_operand.vmem [shape: f32[32,1], index: 6, kind: input, shape index: {}]
  %s7 = inlined_call_operand.vmem [shape: f32[3,32], index: 7, kind: input, shape index: {}]
  %s8 = inlined_call_operand.vmem [shape: f32[3,1], index: 8, kind: input, shape index: {}]
  %s9 = inlined_call_operand.vmem [shape: f32[2,3,256], index: 9, kind: output, shape index: {}]
  %s10 = sld [smem:[#allocation0]]
  $region69: #{tex_model_forward.1} parent=0
    _
  %s12 = ssub.s32 1, %s10
  %s13 = scalar_select 0, %s12, %s10
  loop: start=0, step=1, limit=4
  $region2: #{tex_model_forward.1} parent=0 // loop_pre_header
    _
  $region3: #{tex_model_forward.1} parent=0 // loop_header
    %s15 = sphi 0, %s19
    %p16 = scmp.ge.s32.totalorder %s15, 4
    %s22 = sphi 0, %s34
    %s23 = sphi 0, %s30
    %s24 = sphi 0, %s22
    %s25 = sphi 0, %s23
    %s26 = sphi 0, %s24
    %s27 = sphi 0, %s25
    %s39 = sphi 0, %s41
    %s42 = sphi 0, %s39
    %s43 = sphi 0, %s42
    %s59 = sphi 0, %s43
    %s67 = sphi 0, %s69
    %s70 = sphi 0, %s67
    %s71 = sphi 0, %s70
    %s87 = sphi 0, %s71
    %s91 = sphi 0, %s91
    %s93 = sphi 0, %s91
    %s94 = sphi 0, %s93
    %s108 = sphi 0, %s94
    %s112 = sphi 0, %s112
    %s114 = sphi 0, %s112
    %s115 = sphi 0, %s114
    %s129 = sphi 0, %s115
    %s133 = sphi 0, %s133
    %s135 = sphi 0, %s133
    %s136 = sphi 0, %s135
    %s150 = sphi 0, %s136
    %s154 = sphi 0, %s154
    %s156 = sphi 0, %s154
    %s157 = sphi 0, %s156
    %s171 = sphi 0, %s157
    %s175 = sphi 0, %s175
    %s177 = sphi 0, %s175
    %s178 = sphi 0, %s177
    %s192 = sphi 0, %s178
    %s196 = sphi 0, %s196
    %s198 = sphi 0, %s196
    %s199 = sphi 0, %s198
    %s213 = sphi 0, %s199
    %s217 = sphi 0, %s217
    %s219 = sphi 0, %s217
    %s220 = sphi 0, %s219
    %s234 = sphi 0, %s220
    %s242 = sphi 0, %s244
    %s245 = sphi 0, %s242
    %s246 = sphi 0, %s245
    %s262 = sphi 0, %s246
  $region4: #{tex_model_forward.1} parent=0 // loop_header_branch
    %18 = sbr.rel (%p16) target = $region8
  $region5: #{tex_model_forward.1} parent=0 // loop_body
    %s20 = ssub.s32 %s15, 1
    %s21 = ssub.s32 %s15, 2
    %s28 = sadd.s32 1, %s23
    %p29 = scmp.ge.s32.totalorder %s28, 1
    %s30 = scalar_select %p29, 0, %s28
    %s31 = sadd.s32 1, %s22
    %s32 = scalar_select %p29, %s31, %s22
    %p33 = scmp.ge.s32.totalorder %s32, 2
    %s34 = scalar_select %p33, 0, %s32
    %s35 = ssub.s32 %s22, %s34
    %s36 = ssub.s32 %s23, %s30
    %s37 = sor.u32 %s35, %s36
    %p38 = scmp.eq.s32.totalorder %s37, 0
    %s40 = sadd.s32 %s39, 1
    %s41 = scalar_select %p38, %s39, %s40
    %p44 = pneg %p38
    %p45 = scmp.eq.s32.totalorder %s15, 1
    %p46 = por %p44, %p45
    %p47 = scmp.ne.s32.totalorder %s39, %s42
    %p48 = scmp.eq.s32.totalorder %s15, 0
    %p49 = por %p47, %p48
    %p50 = scmp.ne.s32.totalorder %s39, %s42
    %p51 = scmp.eq.s32.totalorder %s20, 1
    %p52 = por %p50, %p51
    %p53 = scmp.ne.s32.totalorder %s42, %s43
    %p54 = scmp.eq.s32.totalorder %s20, 0
    %p55 = por %p53, %p54
    %p56 = scmp.ne.s32.totalorder %s42, %s43
    %p57 = scmp.eq.s32.totalorder %s21, 1
    %p58 = por %p56, %p57
    %p60 = scmp.ne.s32.totalorder %s43, %s59
    %p61 = scmp.eq.s32.totalorder %s21, 0
    %p62 = por %p60, %p61
    %s63 = ssub.s32 %s22, %s34
    %s64 = ssub.s32 %s23, %s30
    %s65 = sor.u32 %s63, %s64
    %p66 = scmp.eq.s32.totalorder %s65, 0
    %s68 = sadd.s32 %s67, 1
    %s69 = scalar_select %p66, %s67, %s68
    %p72 = pneg %p66
    %p73 = scmp.eq.s32.totalorder %s15, 1
    %p74 = por %p72, %p73
    %p75 = scmp.ne.s32.totalorder %s67, %s70
    %p76 = scmp.eq.s32.totalorder %s15, 0
    %p77 = por %p75, %p76
    %p78 = scmp.ne.s32.totalorder %s67, %s70
    %p79 = scmp.eq.s32.totalorder %s20, 1
    %p80 = por %p78, %p79
    %p81 = scmp.ne.s32.totalorder %s70, %s71
    %p82 = scmp.eq.s32.totalorder %s20, 0
    %p83 = por %p81, %p82
    %p84 = scmp.ne.s32.totalorder %s70, %s71
    %p85 = scmp.eq.s32.totalorder %s21, 1
    %p86 = por %p84, %p85
    %p88 = scmp.ne.s32.totalorder %s71, %s87
    %p89 = scmp.eq.s32.totalorder %s21, 0
    %p90 = por %p88, %p89
    %s92 = sadd.s32 %s91, 1
    %p95 = scmp.eq.s32.totalorder %s15, 1
    %p96 = scmp.ne.s32.totalorder %s91, %s93
    %p97 = scmp.eq.s32.totalorder %s15, 0
    %p98 = por %p96, %p97
    %p99 = scmp.ne.s32.totalorder %s91, %s93
    %p100 = scmp.eq.s32.totalorder %s20, 1
    %p101 = por %p99, %p100
    %p102 = scmp.ne.s32.totalorder %s93, %s94
    %p103 = scmp.eq.s32.totalorder %s20, 0
    %p104 = por %p102, %p103
    %p105 = scmp.ne.s32.totalorder %s93, %s94
    %p106 = scmp.eq.s32.totalorder %s21, 1
    %p107 = por %p105, %p106
    %p109 = scmp.ne.s32.totalorder %s94, %s108
    %p110 = scmp.eq.s32.totalorder %s21, 0
    %p111 = por %p109, %p110
    %s113 = sadd.s32 %s112, 1
    %p116 = scmp.eq.s32.totalorder %s15, 1
    %p117 = scmp.ne.s32.totalorder %s112, %s114
    %p118 = scmp.eq.s32.totalorder %s15, 0
    %p119 = por %p117, %p118
    %p120 = scmp.ne.s32.totalorder %s112, %s114
    %p121 = scmp.eq.s32.totalorder %s20, 1
    %p122 = por %p120, %p121
    %p123 = scmp.ne.s32.totalorder %s114, %s115
    %p124 = scmp.eq.s32.totalorder %s20, 0
    %p125 = por %p123, %p124
    %p126 = scmp.ne.s32.totalorder %s114, %s115
    %p127 = scmp.eq.s32.totalorder %s21, 1
    %p128 = por %p126, %p127
    %p130 = scmp.ne.s32.totalorder %s115, %s129
    %p131 = scmp.eq.s32.totalorder %s21, 0
    %p132 = por %p130, %p131
    %s134 = sadd.s32 %s133, 1
    %p137 = scmp.eq.s32.totalorder %s15, 1
    %p138 = scmp.ne.s32.totalorder %s133, %s135
    %p139 = scmp.eq.s32.totalorder %s15, 0
    %p140 = por %p138, %p139
    %p141 = scmp.ne.s32.totalorder %s133, %s135
    %p142 = scmp.eq.s32.totalorder %s20, 1
    %p143 = por %p141, %p142
    %p144 = scmp.ne.s32.totalorder %s135, %s136
    %p145 = scmp.eq.s32.totalorder %s20, 0
    %p146 = por %p144, %p145
    %p147 = scmp.ne.s32.totalorder %s135, %s136
    %p148 = scmp.eq.s32.totalorder %s21, 1
    %p149 = por %p147, %p148
    %p151 = scmp.ne.s32.totalorder %s136, %s150
    %p152 = scmp.eq.s32.totalorder %s21, 0
    %p153 = por %p151, %p152
    %s155 = sadd.s32 %s154, 1
    %p158 = scmp.eq.s32.totalorder %s15, 1
    %p159 = scmp.ne.s32.totalorder %s154, %s156
    %p160 = scmp.eq.s32.totalorder %s15, 0
    %p161 = por %p159, %p160
    %p162 = scmp.ne.s32.totalorder %s154, %s156
    %p163 = scmp.eq.s32.totalorder %s20, 1
    %p164 = por %p162, %p163
    %p165 = scmp.ne.s32.totalorder %s156, %s157
    %p166 = scmp.eq.s32.totalorder %s20, 0
    %p167 = por %p165, %p166
    %p168 = scmp.ne.s32.totalorder %s156, %s157
    %p169 = scmp.eq.s32.totalorder %s21, 1
    %p170 = por %p168, %p169
    %p172 = scmp.ne.s32.totalorder %s157, %s171
    %p173 = scmp.eq.s32.totalorder %s21, 0
    %p174 = por %p172, %p173
    %s176 = sadd.s32 %s175, 1
    %p179 = scmp.eq.s32.totalorder %s15, 1
    %p180 = scmp.ne.s32.totalorder %s175, %s177
    %p181 = scmp.eq.s32.totalorder %s15, 0
    %p182 = por %p180, %p181
    %p183 = scmp.ne.s32.totalorder %s175, %s177
    %p184 = scmp.eq.s32.totalorder %s20, 1
    %p185 = por %p183, %p184
    %p186 = scmp.ne.s32.totalorder %s177, %s178
    %p187 = scmp.eq.s32.totalorder %s20, 0
    %p188 = por %p186, %p187
    %p189 = scmp.ne.s32.totalorder %s177, %s178
    %p190 = scmp.eq.s32.totalorder %s21, 1
    %p191 = por %p189, %p190
    %p193 = scmp.ne.s32.totalorder %s178, %s192
    %p194 = scmp.eq.s32.totalorder %s21, 0
    %p195 = por %p193, %p194
    %s197 = sadd.s32 %s196, 1
    %p200 = scmp.eq.s32.totalorder %s15, 1
    %p201 = scmp.ne.s32.totalorder %s196, %s198
    %p202 = scmp.eq.s32.totalorder %s15, 0
    %p203 = por %p201, %p202
    %p204 = scmp.ne.s32.totalorder %s196, %s198
    %p205 = scmp.eq.s32.totalorder %s20, 1
    %p206 = por %p204, %p205
    %p207 = scmp.ne.s32.totalorder %s198, %s199
    %p208 = scmp.eq.s32.totalorder %s20, 0
    %p209 = por %p207, %p208
    %p210 = scmp.ne.s32.totalorder %s198, %s199
    %p211 = scmp.eq.s32.totalorder %s21, 1
    %p212 = por %p210, %p211
    %p214 = scmp.ne.s32.totalorder %s199, %s213
    %p215 = scmp.eq.s32.totalorder %s21, 0
    %p216 = por %p214, %p215
    %s218 = sadd.s32 %s217, 1
    %p221 = scmp.eq.s32.totalorder %s15, 1
    %p222 = scmp.ne.s32.totalorder %s217, %s219
    %p223 = scmp.eq.s32.totalorder %s15, 0
    %p224 = por %p222, %p223
    %p225 = scmp.ne.s32.totalorder %s217, %s219
    %p226 = scmp.eq.s32.totalorder %s20, 1
    %p227 = por %p225, %p226
    %p228 = scmp.ne.s32.totalorder %s219, %s220
    %p229 = scmp.eq.s32.totalorder %s20, 0
    %p230 = por %p228, %p229
    %p231 = scmp.ne.s32.totalorder %s219, %s220
    %p232 = scmp.eq.s32.totalorder %s21, 1
    %p233 = por %p231, %p232
    %p235 = scmp.ne.s32.totalorder %s220, %s234
    %p236 = scmp.eq.s32.totalorder %s21, 0
    %p237 = por %p235, %p236
    %s238 = ssub.s32 %s22, %s34
    %s239 = ssub.s32 %s23, %s30
    %s240 = sor.u32 %s238, %s239
    %p241 = scmp.eq.s32.totalorder %s240, 0
    %s243 = sadd.s32 %s242, 1
    %s244 = scalar_select %p241, %s242, %s243
    %p247 = pneg %p241
    %p248 = scmp.eq.s32.totalorder %s15, 1
    %p249 = por %p247, %p248
    %p250 = scmp.ne.s32.totalorder %s242, %s245
    %p251 = scmp.eq.s32.totalorder %s15, 0
    %p252 = por %p250, %p251
    %p253 = scmp.ne.s32.totalorder %s242, %s245
    %p254 = scmp.eq.s32.totalorder %s20, 1
    %p255 = por %p253, %p254
    %p256 = scmp.ne.s32.totalorder %s245, %s246
    %p257 = scmp.eq.s32.totalorder %s20, 0
    %p258 = por %p256, %p257
    %p259 = scmp.ne.s32.totalorder %s245, %s246
    %p260 = scmp.eq.s32.totalorder %s21, 1
    %p261 = por %p259, %p260
    %p263 = scmp.ne.s32.totalorder %s246, %s262
    %p264 = scmp.eq.s32.totalorder %s21, 0
    %p265 = por %p263, %p264
    %p266 = scmp.le.s32.totalorder 1, %s15
    %p267 = scmp.lt.s32.totalorder %s15, 3
    %p268 = pnand %p266, %p267
    %p269 = pneg %p268
    // Predicated region
    $region9: #{tex_model_forward.1} parent=5 // pred_check
      _
    $region10: #{tex_model_forward.1} parent=5 // pred_check_branch
      %271 = sbr.rel (%p268) target = $region12
    $region11: #{tex_model_forward.1} parent=5 // pred_region
      %s272 = ssub.s32 %s15, 1
      // Predicated region
      $region13: #{tex_model_forward.1} parent=11 // pred_check
        %p273 = pneg %p104
      $region14: #{tex_model_forward.1} parent=11 // pred_check_branch
        %275 = sbr.rel (%p273) target = $region16
      $region15: #{tex_model_forward.1} parent=11 // pred_region
        _
      $region16: #{tex_model_forward.1} parent=11 // pred_fallthru
        _
      // Predicated region
      $region17: #{tex_model_forward.1} parent=11 // pred_check
        %p276 = pneg %p125
      $region18: #{tex_model_forward.1} parent=11 // pred_check_branch
        %278 = sbr.rel (%p276) target = $region20
      $region19: #{tex_model_forward.1} parent=11 // pred_region
        _
      $region20: #{tex_model_forward.1} parent=11 // pred_fallthru
        _
      // Predicated region
      $region21: #{tex_model_forward.1} parent=11 // pred_check
        %p279 = pneg %p146
      $region22: #{tex_model_forward.1} parent=11 // pred_check_branch
        %281 = sbr.rel (%p279) target = $region24
      $region23: #{tex_model_forward.1} parent=11 // pred_region
        _
      $region24: #{tex_model_forward.1} parent=11 // pred_fallthru
        _
      // Predicated region
      $region25: #{tex_model_forward.1} parent=11 // pred_check
        %p282 = pneg %p167
      $region26: #{tex_model_forward.1} parent=11 // pred_check_branch
        %284 = sbr.rel (%p282) target = $region28
      $region27: #{tex_model_forward.1} parent=11 // pred_region
        _
      $region28: #{tex_model_forward.1} parent=11 // pred_fallthru
        _
      // Predicated region
      $region29: #{tex_model_forward.1} parent=11 // pred_check
        %p285 = pneg %p188
      $region30: #{tex_model_forward.1} parent=11 // pred_check_branch
        %287 = sbr.rel (%p285) target = $region32
      $region31: #{tex_model_forward.1} parent=11 // pred_region
        _
      $region32: #{tex_model_forward.1} parent=11 // pred_fallthru
        _
      // Predicated region
      $region33: #{tex_model_forward.1} parent=11 // pred_check
        %p288 = pneg %p209
      $region34: #{tex_model_forward.1} parent=11 // pred_check_branch
        %290 = sbr.rel (%p288) target = $region36
      $region35: #{tex_model_forward.1} parent=11 // pred_region
        _
      $region36: #{tex_model_forward.1} parent=11 // pred_fallthru
        _
      // Predicated region
      $region37: #{tex_model_forward.1} parent=11 // pred_check
        %p291 = pneg %p230
      $region38: #{tex_model_forward.1} parent=11 // pred_check_branch
        %293 = sbr.rel (%p291) target = $region40
      $region39: #{tex_model_forward.1} parent=11 // pred_region
        _
      $region40: #{tex_model_forward.1} parent=11 // pred_fallthru
        _
    $region12: #{tex_model_forward.1} parent=5 // pred_fallthru
      _
    %p294 = scmp.lt.s32.totalorder %s15, 2
    // Predicated region
    $region41: #{tex_model_forward.1} parent=5 // pred_check
      %p295 = pneg %p294
    $region42: #{tex_model_forward.1} parent=5 // pred_check_branch
      %297 = sbr.rel (%p295) target = $region44
    $region43: #{tex_model_forward.1} parent=5 // pred_region
      // Predicated region
      $region45: #{tex_model_forward.1} parent=43 // pred_check
        %p298 = pneg %p49
      $region46: #{tex_model_forward.1} parent=43 // pred_check_branch
        %300 = sbr.rel (%p298) target = $region48
      $region47: #{tex_model_forward.1} parent=43 // pred_region
        %s301 = smul.u32 2, %s23
        %p302 = scmp.lt.s32.totalorder %s22, 1
        %s303 = scalar_select %p302, %s22, 1
        %p304 = scmp.lt.s32.totalorder %s301, 1
        %s305 = scalar_select %p304, %s301, 1
        %s306 = smul.addr %s303, 8
        %s307 = sadd.s32 %s305, %s306
        %s308 = smul.addr %s307, 4
        %s309 = scalar_lea.vmem %s0, %s308
        %s310 = smul.u32 2, %s23
      $region48: #{tex_model_forward.1} parent=43 // pred_fallthru
        _
      // Predicated region
      $region49: #{tex_model_forward.1} parent=43 // pred_check
        %p311 = pneg %p77
      $region50: #{tex_model_forward.1} parent=43 // pred_check_branch
        %313 = sbr.rel (%p311) target = $region52
      $region51: #{tex_model_forward.1} parent=43 // pred_region
        %s314 = smul.u32 2, %s23
        %p315 = scmp.lt.s32.totalorder %s22, 1
        %s316 = scalar_select %p315, %s22, 1
        %p317 = scmp.lt.s32.totalorder %s314, 1
        %s318 = scalar_select %p317, %s314, 1
        %s319 = smul.addr %s316, 2
        %s320 = sadd.s32 %s318, %s319
        %s321 = scalar_lea.vmem %s1, %s320
        %s322 = smul.u32 2, %s23
      $region52: #{tex_model_forward.1} parent=43 // pred_fallthru
        _
    $region44: #{tex_model_forward.1} parent=5 // pred_fallthru
      _
    %p323 = scmp.le.s32.totalorder 1, %s15
    %p324 = scmp.lt.s32.totalorder %s15, 3
    %p325 = pnand %p323, %p324
    %p326 = pneg %p325
    // Predicated region
    $region53: #{tex_model_forward.1} parent=5 // pred_check
      _
    $region54: #{tex_model_forward.1} parent=5 // pred_check_branch
      %328 = sbr.rel (%p325) target = $region56
    $region55: #{tex_model_forward.1} parent=5 // pred_region
      %s329 = ssub.s32 %s15, 1
      %s330 = smul.u32 2, %s25
      %p331 = scmp.lt.s32.totalorder %s24, 1
      %s332 = scalar_select %p331, %s24, 1
      %p333 = scmp.lt.s32.totalorder %s330, 1
      %s334 = scalar_select %p333, %s330, 1
      %s335 = smul.addr %s332, 8
      %s336 = sadd.s32 %s334, %s335
      %s337 = smul.addr %s336, 4
      %s338 = scalar_lea.vmem %s0, %s337
      %p339 = pneg %p55
      %p340 = pneg %p52
      %s341 = smul.u32 2, %s25
      %p342 = scmp.lt.s32.totalorder %s24, 1
      %s343 = scalar_select %p342, %s24, 1
      %p344 = scmp.lt.s32.totalorder %s341, 1
      %s345 = scalar_select %p344, %s341, 1
      %s346 = smul.addr %s343, 2
      %s347 = sadd.s32 %s345, %s346
      %s348 = scalar_lea.vmem %s1, %s347
      %p349 = pneg %p83
      %p350 = pneg %p80
      %p351 = pneg %p104
      %p352 = pneg %p101
      %p353 = pneg %p125
      %p354 = pneg %p122
      %p355 = pneg %p146
      %p356 = pneg %p143
      %p357 = pneg %p167
      %p358 = pneg %p164
      %p359 = pneg %p188
      %p360 = pneg %p185
      %p361 = pneg %p209
      %p362 = pneg %p206
      %p363 = pneg %p230
      %p364 = pneg %p227
      %p365 = pneg %p258
      %p366 = pneg %p255
      %s367 = smul.u32 2, %s25
      %p368 = scmp.lt.s32.totalorder %s24, 1
      %s369 = scalar_select %p368, %s24, 1
      %p370 = scmp.lt.s32.totalorder %s367, 1
      %s371 = scalar_select %p370, %s367, 1
      %s372 = smul.addr %s369, 2
      %s373 = sadd.s32 %s371, %s372
      %s374 = smul.addr %s373, 4
      %s375 = scalar_lea.vmem %s9, %s374
      %s376 = smul.u32 2, %s25
      %p377 = scmp.lt.s32.totalorder %s24, 1
      %s378 = scalar_select %p377, %s24, 1
      %p379 = scmp.lt.s32.totalorder %s376, 1
      %s380 = scalar_select %p379, %s376, 1
      %s381 = smul.addr %s378, 8
      %s382 = sadd.s32 %s380, %s381
      %s383 = smul.addr %s382, 4
      %s384 = scalar_lea.vmem %s0, %s383
      %s385 = smul.u32 2, %s25
      %s386 = smul.u32 2, %s25
      %p387 = scmp.lt.s32.totalorder %s24, 1
      %s388 = scalar_select %p387, %s24, 1
      %p389 = scmp.lt.s32.totalorder %s386, 1
      %s390 = scalar_select %p389, %s386, 1
      %s391 = smul.addr %s388, 2
      %s392 = sadd.s32 %s390, %s391
      %s393 = scalar_lea.vmem %s1, %s392
      %s394 = smul.u32 2, %s25
      %s395 = smul.u32 2, %s25
      %p396 = scmp.lt.s32.totalorder %s24, 1
      %s397 = scalar_select %p396, %s24, 1
      %p398 = scmp.lt.s32.totalorder %s395, 1
      %s399 = scalar_select %p398, %s395, 1
      %s400 = smul.addr %s397, 2
      %s401 = sadd.s32 %s399, %s400
      %s402 = smul.addr %s401, 4
      %s403 = scalar_lea.vmem %s9, %s402
      %s404 = smul.u32 2, %s25
      %v406 = vld [vmem:[%s384] sm:$0xff]
      %v407 = vld [vmem:[%s384 + $0x8] sm:$0xff]
      %v408 = vld [vmem:[%s384 + $0x10] sm:$0xff]
      %v409 = vld [vmem:[%s384 + $0x18] sm:$0xff]
      %v410 = vld [vmem:[%s2] sm:$0xf]
      %v411 = vld [vmem:[%s2 + $0x4] sm:$0xf]
      %v412 = vld [vmem:[%s2 + $0x8] sm:$0xf]
      %v413 = vld [vmem:[%s2 + $0xc] sm:$0xf]
      %v414 = vld [vmem:[%s3] sm:$0xff]
      %v415 = vld [vmem:[%s3 + $0x8] sm:$0xff]
      %v416 = vld [vmem:[%s3 + $0x10] sm:$0xff]
      %v417 = vld [vmem:[%s3 + $0x18] sm:$0xff]
      %v418 = vld [vmem:[%s393] sm:$0x3]
      %420 = vset.pattern.permute.xlu0 0
      %421 = vperm.xlu0 %420, %v414
      %v422 = vpop.permute.xlu0 %421
      %425 = vset.pattern.permute.xlu0 0
      %426 = vperm.xlu0 %425, %v415
      %v427 = vpop.permute.xlu0 %426
      %430 = vset.pattern.permute.xlu0 0
      %431 = vperm.xlu0 %430, %v416
      %v432 = vpop.permute.xlu0 %431
      %435 = vset.pattern.permute.xlu0 0
      %436 = vperm.xlu0 %435, %v417
      %v437 = vpop.permute.xlu0 %436
      %v440 = vperm.slane %v418, 0
      %v441 = vperm.slane %v418, 1
      %v444 = vmul.f32 %v422, %v440
      %v445 = vmul.f32 %v422, %v441
      %v446 = vmul.f32 %v427, %v440
      %v447 = vmul.f32 %v427, %v441
      %v448 = vmul.f32 %v432, %v440
      %v449 = vmul.f32 %v432, %v441
      %v450 = vmul.f32 %v437, %v440
      %v451 = vmul.f32 %v437, %v441
      %v456 = vunpack.c.l.b16 %v410
      %v457 = vunpack.c.l.b16 %v411
      %v458 = vunpack.c.l.b16 %v412
      %v459 = vunpack.c.l.b16 %v413
      %v460 = vpack.c.b16 %v457, %v456
      %v461 = vpack.c.b16 %v459, %v458
      %v466 = vunpack.c.l.b16 %v406
      %v467 = vunpack.c.h.b16 %v406
      %v468 = vunpack.c.l.b16 %v407
      %v469 = vunpack.c.h.b16 %v407
      %v470 = vunpack.c.l.b16 %v408
      %v471 = vunpack.c.h.b16 %v408
      %v472 = vunpack.c.l.b16 %v409
      %v473 = vunpack.c.h.b16 %v409
      %v474 = vpack.c.b16 %v468, %v466
      %v475 = vpack.c.b16 %v469, %v467
      %v476 = vpack.c.b16 %v472, %v470
      %v477 = vpack.c.b16 %v473, %v471
      %vm482 = vcmask 261120
      %v484 = vsel %vm482, %v460, 0
      %v487 = vsel %vm482, %v461, 0
      %489 = vmatpush.bf16.msra.mxu0 0
      %490 = vmatpush.bf16.msra.mxu0 0
      %491 = vmatpush.bf16.msra.mxu0 0
      %492 = vmatpush.bf16.msra.mxu0 0
      %493 = vmatpush.bf16.msra.mxu0 0
      %494 = vmatpush.bf16.msra.mxu0 0
      %495 = vmatpush.bf16.msra.mxu0 %v476
      %496 = vmatpush.bf16.msra.mxu0 %v474
      %497 = vmatmul.bf16.gmra.mxu0 %v484
      %v498 = vpop.f32.mrf.mxu0
      %v499 = vadd.f32 %v444, %v498
      %v500 = vpop.f32.mrf.mxu0
      %v501 = vadd.f32 %v446, %v500
      %502 = vmatmul.bf16.gmra.mxu0 %v487
      %v503 = vpop.f32.mrf.mxu0
      %v504 = vadd.f32 %v448, %v503
      %v505 = vpop.f32.mrf.mxu0
      %v506 = vadd.f32 %v450, %v505
      %507 = vdwg.mxu0
      %508 = vmatpush.bf16.msra.mxu0 0
      %509 = vmatpush.bf16.msra.mxu0 0
      %510 = vmatpush.bf16.msra.mxu0 0
      %511 = vmatpush.bf16.msra.mxu0 0
      %512 = vmatpush.bf16.msra.mxu0 0
      %513 = vmatpush.bf16.msra.mxu0 0
      %514 = vmatpush.bf16.msra.mxu0 %v477
      %515 = vmatpush.bf16.msra.mxu0 %v475
      %516 = vmatmul.bf16.gmra.mxu0 %v484
      %v517 = vpop.f32.mrf.mxu0
      %v518 = vadd.f32 %v445, %v517
      %v519 = vpop.f32.mrf.mxu0
      %v520 = vadd.f32 %v447, %v519
      %521 = vmatmul.bf16.gmra.mxu0 %v487
      %v522 = vpop.f32.mrf.mxu0
      %v523 = vadd.f32 %v449, %v522
      %v524 = vpop.f32.mrf.mxu0
      %v525 = vadd.f32 %v451, %v524
      %526 = vdwg.mxu0
      %v527 = vld [vmem:[%s4] sm:$0xff]
      %v528 = vld [vmem:[%s4 + $0x8] sm:$0xff]
      %v529 = vld [vmem:[%s4 + $0x10] sm:$0xff]
      %v530 = vld [vmem:[%s4 + $0x18] sm:$0xff]
      %532 = vset.pattern.permute.xlu0 0
      %533 = vperm.xlu0 %532, %v527
      %v534 = vpop.permute.xlu0 %533
      %537 = vset.pattern.permute.xlu0 0
      %538 = vperm.xlu0 %537, %v528
      %v539 = vpop.permute.xlu0 %538
      %542 = vset.pattern.permute.xlu0 0
      %543 = vperm.xlu0 %542, %v529
      %v544 = vpop.permute.xlu0 %543
      %547 = vset.pattern.permute.xlu0 0
      %548 = vperm.xlu0 %547, %v530
      %v549 = vpop.permute.xlu0 %548
      %v551 = vadd.f32 %v499, %v534
      %v552 = vadd.f32 %v518, %v534
      %v553 = vadd.f32 %v501, %v539
      %v554 = vadd.f32 %v520, %v539
      %v555 = vadd.f32 %v504, %v544
      %v556 = vadd.f32 %v523, %v544
      %v557 = vadd.f32 %v506, %v549
      %v558 = vadd.f32 %v525, %v549
      %v559 = vmax.f32 %v551, 0.0
      %v560 = vmax.f32 %v552, 0.0
      %v561 = vmax.f32 %v553, 0.0
      %v562 = vmax.f32 %v554, 0.0
      %v563 = vmax.f32 %v555, 0.0
      %v564 = vmax.f32 %v556, 0.0
      %v565 = vmax.f32 %v557, 0.0
      %v566 = vmax.f32 %v558, 0.0
      %v567 = vld [vmem:[%s5] sm:$0xff]
      %v568 = vld [vmem:[%s5 + $0x8] sm:$0xff]
      %v569 = vld [vmem:[%s5 + $0x10] sm:$0xff]
      %v570 = vld [vmem:[%s5 + $0x18] sm:$0xff]
      %v571 = vld [vmem:[%s6] sm:$0xff]
      %v572 = vld [vmem:[%s6 + $0x8] sm:$0xff]
      %v573 = vld [vmem:[%s6 + $0x10] sm:$0xff]
      %v574 = vld [vmem:[%s6 + $0x18] sm:$0xff]
      %576 = vset.pattern.permute.xlu0 0
      %577 = vperm.xlu0 %576, %v571
      %v578 = vpop.permute.xlu0 %577
      %581 = vset.pattern.permute.xlu0 0
      %582 = vperm.xlu0 %581, %v572
      %v583 = vpop.permute.xlu0 %582
      %586 = vset.pattern.permute.xlu0 0
      %587 = vperm.xlu0 %586, %v573
      %v588 = vpop.permute.xlu0 %587
      %591 = vset.pattern.permute.xlu0 0
      %592 = vperm.xlu0 %591, %v574
      %v593 = vpop.permute.xlu0 %592
      %v596 = vsel %vm482, %v567, 0
      %v599 = vsel %vm482, %v568, 0
      %v602 = vsel %vm482, %v569, 0
      %v605 = vsel %vm482, %v570, 0
      %607 = vmatpush.msra.mxu0 0.0
      %608 = vmatpush.msra.mxu0 0.0
      %609 = vmatpush.msra.mxu0 0.0
      %610 = vmatpush.msra.mxu0 0.0
      %611 = vmatpush.msra.mxu0 0.0
      %612 = vmatpush.msra.mxu0 0.0
      %613 = vmatpush.msra.mxu0 0.0
      %614 = vmatpush.msra.mxu0 0.0
      %615 = vmatpush.msra.mxu0 0.0
      %616 = vmatpush.msra.mxu0 0.0
      %617 = vmatpush.msra.mxu0 0.0
      %618 = vmatpush.msra.mxu0 0.0
      %619 = vmatpush.msra.mxu0 %v565
      %620 = vmatpush.msra.mxu0 %v563
      %621 = vmatpush.msra.mxu0 %v561
      %622 = vmatpush.msra.mxu0 %v559
      %623 = vmatmul.f32.gmra.mxu0 %v596
      %v624 = vpop.f32.mrf.mxu0
      %v625 = vadd.f32 %v578, %v624
      %626 = vmatmul.f32.gmra.mxu0 %v599
      %v627 = vpop.f32.mrf.mxu0
      %v628 = vadd.f32 %v583, %v627
      %629 = vmatmul.f32.gmra.mxu0 %v602
      %v630 = vpop.f32.mrf.mxu0
      %v631 = vadd.f32 %v588, %v630
      %632 = vmatmul.f32.gmra.mxu0 %v605
      %v633 = vpop.f32.mrf.mxu0
      %v634 = vadd.f32 %v593, %v633
      %635 = vdwg.mxu0
      %636 = vmatpush.msra.mxu0 0.0
      %637 = vmatpush.msra.mxu0 0.0
      %638 = vmatpush.msra.mxu0 0.0
      %639 = vmatpush.msra.mxu0 0.0
      %640 = vmatpush.msra.mxu0 0.0
      %641 = vmatpush.msra.mxu0 0.0
      %642 = vmatpush.msra.mxu0 0.0
      %643 = vmatpush.msra.mxu0 0.0
      %644 = vmatpush.msra.mxu0 0.0
      %645 = vmatpush.msra.mxu0 0.0
      %646 = vmatpush.msra.mxu0 0.0
      %647 = vmatpush.msra.mxu0 0.0
      %648 = vmatpush.msra.mxu0 %v566
      %649 = vmatpush.msra.mxu0 %v564
      %650 = vmatpush.msra.mxu0 %v562
      %651 = vmatpush.msra.mxu0 %v560
      %652 = vmatmul.f32.gmra.mxu0 %v596
      %v653 = vpop.f32.mrf.mxu0
      %v654 = vadd.f32 %v578, %v653
      %655 = vmatmul.f32.gmra.mxu0 %v599
      %v656 = vpop.f32.mrf.mxu0
      %v657 = vadd.f32 %v583, %v656
      %658 = vmatmul.f32.gmra.mxu0 %v602
      %v659 = vpop.f32.mrf.mxu0
      %v660 = vadd.f32 %v588, %v659
      %661 = vmatmul.f32.gmra.mxu0 %v605
      %v662 = vpop.f32.mrf.mxu0
      %v663 = vadd.f32 %v593, %v662
      %664 = vdwg.mxu0
      %v665 = vmax.f32 %v625, 0.0
      %v666 = vmax.f32 %v654, 0.0
      %v667 = vmax.f32 %v628, 0.0
      %v668 = vmax.f32 %v657, 0.0
      %v669 = vmax.f32 %v631, 0.0
      %v670 = vmax.f32 %v660, 0.0
      %v671 = vmax.f32 %v634, 0.0
      %v672 = vmax.f32 %v663, 0.0
      %v673 = vld [vmem:[%s7] sm:$0x7]
      %v674 = vld [vmem:[%s8] sm:$0x7]
      %676 = vset.pattern.permute.xlu0 0
      %677 = vperm.xlu0 %676, %v674
      %v678 = vpop.permute.xlu0 %677
      %v681 = vsel %vm482, %v673, 0
      %683 = vmatpush.msra.mxu0 0.0
      %684 = vmatpush.msra.mxu0 0.0
      %685 = vmatpush.msra.mxu0 0.0
      %686 = vmatpush.msra.mxu0 0.0
      %687 = vmatpush.msra.mxu0 0.0
      %688 = vmatpush.msra.mxu0 0.0
      %689 = vmatpush.msra.mxu0 0.0
      %690 = vmatpush.msra.mxu0 0.0
      %691 = vmatpush.msra.mxu0 0.0
      %692 = vmatpush.msra.mxu0 0.0
      %693 = vmatpush.msra.mxu0 0.0
      %694 = vmatpush.msra.mxu0 0.0
      %695 = vmatpush.msra.mxu0 %v671
      %696 = vmatpush.msra.mxu0 %v669
      %697 = vmatpush.msra.mxu0 %v667
      %698 = vmatpush.msra.mxu0 %v665
      %699 = vmatmul.f32.gmra.mxu0 %v681
      %v700 = vpop.f32.mrf.mxu0
      %v701 = vadd.f32 %v678, %v700
      %702 = vdwg.mxu0
      %703 = vmatpush.msra.mxu0 0.0
      %704 = vmatpush.msra.mxu0 0.0
      %705 = vmatpush.msra.mxu0 0.0
      %706 = vmatpush.msra.mxu0 0.0
      %707 = vmatpush.msra.mxu0 0.0
      %708 = vmatpush.msra.mxu0 0.0
      %709 = vmatpush.msra.mxu0 0.0
      %710 = vmatpush.msra.mxu0 0.0
      %711 = vmatpush.msra.mxu0 0.0
      %712 = vmatpush.msra.mxu0 0.0
      %713 = vmatpush.msra.mxu0 0.0
      %714 = vmatpush.msra.mxu0 0.0
      %715 = vmatpush.msra.mxu0 %v672
      %716 = vmatpush.msra.mxu0 %v670
      %717 = vmatpush.msra.mxu0 %v668
      %718 = vmatpush.msra.mxu0 %v666
      %719 = vmatmul.f32.gmra.mxu0 %v681
      %v720 = vpop.f32.mrf.mxu0
      %v721 = vadd.f32 %v678, %v720
      %722 = vdwg.mxu0
      %v723 = vsub.f32 0.0, %v701
      %v724 = vsub.f32 0.0, %v721
      %v725 = vmul.f32 %v723, 1.442695
      %v726 = vpow.pop %v725
      %v727 = vmul.f32 %v724, 1.442695
      %v728 = vpow.pop %v727
      %v729 = vadd.f32 %v726, 1.0
      %v730 = vadd.f32 %v728, 1.0
      %v731 = vrcp.pop %v729
      %v732 = vrcp.pop %v730
      %v735 = vrot.slane %v732, 4
      %vm736 = vcmask 1043456
      %v737 = vsel %vm736, %v731, %v735
      %739 = vst [vmem:[%s403] sm:$0x77] %v737
      %s740 = smul.u32 2, %s25
      %p741 = scmp.lt.s32.totalorder %s24, 1
      %s742 = scalar_select %p741, %s24, 1
      %p743 = scmp.lt.s32.totalorder %s740, 1
      %s744 = scalar_select %p743, %s740, 1
      %s745 = smul.addr %s742, 2
      %s746 = sadd.s32 %s744, %s745
      %s747 = smul.addr %s746, 4
      %s748 = scalar_lea.vmem %s9, %s747
      // Predicated region
      $region57: #{tex_model_forward.1} parent=55 // pred_check
        %p749 = pneg %p255
      $region58: #{tex_model_forward.1} parent=55 // pred_check_branch
        %751 = sbr.rel (%p749) target = $region60
      $region59: #{tex_model_forward.1} parent=55 // pred_region
        %s752 = smul.u32 2, %s25
      $region60: #{tex_model_forward.1} parent=55 // pred_fallthru
        _
    $region56: #{tex_model_forward.1} parent=5 // pred_fallthru
      _
    %p753 = scmp.le.s32.totalorder 2, %s15
    // Predicated region
    $region61: #{tex_model_forward.1} parent=5 // pred_check
      %p754 = pneg %p753
    $region62: #{tex_model_forward.1} parent=5 // pred_check_branch
      %756 = sbr.rel (%p754) target = $region64
    $region63: #{tex_model_forward.1} parent=5 // pred_region
      %s757 = ssub.s32 %s15, 2
      // Predicated region
      $region65: #{tex_model_forward.1} parent=63 // pred_check
        %p758 = pneg %p261
      $region66: #{tex_model_forward.1} parent=63 // pred_check_branch
        %760 = sbr.rel (%p758) target = $region68
      $region67: #{tex_model_forward.1} parent=63 // pred_region
        %s761 = smul.u32 2, %s27
        %p762 = scmp.lt.s32.totalorder %s26, 1
        %s763 = scalar_select %p762, %s26, 1
        %p764 = scmp.lt.s32.totalorder %s761, 1
        %s765 = scalar_select %p764, %s761, 1
        %s766 = smul.addr %s763, 2
        %s767 = sadd.s32 %s765, %s766
        %s768 = smul.addr %s767, 4
        %s769 = scalar_lea.vmem %s9, %s768
      $region68: #{tex_model_forward.1} parent=63 // pred_fallthru
        _
    $region64: #{tex_model_forward.1} parent=5 // pred_fallthru
      _
  $region6: #{tex_model_forward.1} parent=0 // loop_footer
    %s19 = sadd.s32 1, %s15
  $region7: #{tex_model_forward.1} parent=0 // loop_footer_branch
    %14 = sbr.rel target = $region3
  $region8: #{tex_model_forward.1} parent=0 // loop_exit
    _

</llo_original>
